<compile_context>
chip_gen: v7x
topology: tpu7x:2x2x1
jax: 0.10.0
libtpu: 0.0.40
codegen_flags: <defaults>
</compile_context>

<pallas_src>
import functools

import jax
import jax.numpy as jnp
from jax.experimental import pallas as pl
from jax.experimental.pallas import tpu as pltpu

_NEG = -1.0e30  # plain Python float -> lowers as a literal, never a captured const


def _round_up(x, m):
    return ((x + m - 1) // m) * m


def _vmem_budget_and_limit():
    """Generation-aware VMEM budget (tile selection) and Mosaic vmem limit."""
    cap = 64 * 1024 * 1024            # conservative fallback (v7x: 64 MiB / TC)
    try:
        cap = int(pltpu.get_tpu_info().vmem_capacity_bytes)
    except Exception:
        pass
    # v5e/v6e (128 MiB): ~96 MiB budget / ~110 MiB limit;  v7x (64 MiB): ~48 / ~55.
    return int(cap * 0.75), int(cap * 0.86)


def _choose_tiles(a_rows, n_rows, d_pad, feat_bytes, budget, has_mask):
    """Pick (tile_rows, tile_n, n_pad).

    Prefer a fully VMEM-resident, single-buffered contrast with the largest
    anchor tile that fits (biased to >=256 rows for the 2x256^2 MXUs of
    v6e/v7x); fall back to tiling the contrast axis (online softmax) when
    N*D does not fit the per-core VMEM budget.
    """
    a_cap = _round_up(max(a_rows, 1), 8)

    def vmem_use(ta, tn, resident):
        cbufs = 1 if resident else 2
        contrast = cbufs * (d_pad * tn * feat_bytes + 8 * tn * 4)   # + label row
        anchor = 2 * ta * (d_pad * feat_bytes + 128 * 4)            # + packed sides
        maskst = 2 * ta * tn * 4 if has_mask else 0                 # streamed weights
        scratch = 3 * ta * 128 * 4 + 2 * 8 * max(ta, 128) * 4       # m/l/ps + out
        live = 5 * ta * tn * 4                                      # [TA, TN] temps
        return contrast + anchor + maskst + scratch + live

    n128 = _round_up(n_rows, 128)
    for ta in (1024, 512, 256, 128, 64, 32, 16, 8):
        ta = min(ta, a_cap)
        if vmem_use(ta, n128, True) <= budget:
            return ta, n128, n128
    # Contrast-tiled online-softmax fallback (needed for large N*D, esp. v7x).
    for ta in (512, 256, 128):
        ta = min(ta, a_cap)
        for tn in (2048, 1024, 512, 256, 128):
            if vmem_use(ta, tn, False) <= budget:
                return ta, tn, _round_up(n_rows, tn)
    return min(128, a_cap), 128, _round_up(n_rows, 128)


def _block_spec(shape, index_map, n_buffers=None):
    """BlockSpec with an optional buffer-count hint (graceful fallback)."""
    if n_buffers is not None:
        try:
            return pl.BlockSpec(shape, index_map,
                                pipeline_mode=pl.Buffered(n_buffers))
        except Exception:       # older jax without pipeline_mode / Buffered
            pass
    return pl.BlockSpec(shape, index_map)


# ---------------------------------------------------------------------------
# Kernels
# ---------------------------------------------------------------------------

def _supcon_tile_body(a_ref, c_ref, out_ref, m_sc, l_sc, ps_sc, pos_fn, pcnt_fn,
                      *, n_valid, tile_rows, tile_n, inv_temp, loss_scale):
    i = pl.program_id(0)              # anchor-row tile
    k = pl.program_id(1)              # contrast tile (reduction axis, innermost)

    @pl.when(k == 0)
    def _():
        m_sc[...] = jnp.full_like(m_sc, _NEG)
        l_sc[...] = jnp.zeros_like(l_sc)
        ps_sc[...] = jnp.zeros_like(ps_sc)

    # [TA, D] x [D, TN] on the MXU; contrast was pre-transposed in the wrapper
    # so no per-step transpose is needed.  f32 accumulation.
    s = jax.lax.dot_general(
        a_ref[...], c_ref[...], (((1,), (0,)), ((), ())),
        preferred_element_type=jnp.float32) * inv_temp

    row = jax.lax.broadcasted_iota(jnp.int32, s.shape, 0) + i * tile_rows
    col = jax.lax.broadcasted_iota(jnp.int32, s.shape, 1) + k * tile_n
    lmask = jnp.logical_and(col < n_valid, col != row)     # valid column & not-self

    # Online-softmax denominator: running max + rescaled exp-sum.
    masked_s = jnp.where(lmask, s, _NEG)
    m_new = jnp.maximum(m_sc[...], jnp.max(masked_s, axis=1, keepdims=True))
    l_sc[...] = (l_sc[...] * jnp.exp(m_sc[...] - m_new)
                 + jnp.sum(jnp.exp(masked_s - m_new), axis=1, keepdims=True))
    m_sc[...] = m_new

    # sum(pos * logits) == sum(pos * s) - pos_count * (max + log_denom); the
    # first term needs no max correction, so accumulate it directly.
    ps_sc[...] += jnp.sum(pos_fn(lmask) * s, axis=1, keepdims=True)

    @pl.when(k == pl.num_programs(1) - 1)
    def _():
        pcnt = pcnt_fn()                                    # [TA, 1] f32
        log_denom = m_sc[...] + jnp.log(l_sc[...])
        # TODO(synk): rows with pos_count == 0 yield 0 here instead of the
        # PyTorch module's NaN (0/0); padded rows rely on this and are sliced
        # off in the wrapper.
        mean_lp = jnp.where(
            pcnt > 0.0,
            (ps_sc[...] - log_denom * pcnt) / jnp.maximum(pcnt, 1.0),
            0.0)
        # Lane-dense store: (TA, 1) -> (1, TA) so the output block is written
        # with unmasked vector stores.
        out_ref[...] = jnp.reshape(loss_scale * mean_lp, (1, tile_rows))


def _supcon_labels_kernel(side_ref, clab_ref, a_ref, c_ref, out_ref,
                          m_sc, l_sc, ps_sc, **kw):
    def pos_fn(lmask):
        eq = side_ref[:, 0:1] == clab_ref[...]              # [TA,1] == [1,TN]
        return jnp.where(jnp.logical_and(eq, lmask), 1.0, 0.0)

    def pcnt_fn():
        return side_ref[:, 1:2].astype(jnp.float32)

    _supcon_tile_body(a_ref, c_ref, out_ref, m_sc, l_sc, ps_sc,
                      pos_fn, pcnt_fn, **kw)


def _supcon_mask_kernel(pcnt_ref, posw_ref, a_ref, c_ref, out_ref,
                        m_sc, l_sc, ps_sc, **kw):
    def pos_fn(lmask):
        return posw_ref[...] * lmask.astype(jnp.float32)

    def pcnt_fn():
        return pcnt_ref[...]

    _supcon_tile_body(a_ref, c_ref, out_ref, m_sc, l_sc, ps_sc,
                      pos_fn, pcnt_fn, **kw)


# ---------------------------------------------------------------------------
# Wrapper
# ---------------------------------------------------------------------------

def supcon_loss(features, labels=None, mask=None, *, temperature=0.07,
                contrast_mode="all", base_temperature=0.07,
                matmul_dtype=jnp.bfloat16, _debug_tiles=None):
    """JAX/Pallas equivalent of SupConLoss.forward.  Returns a scalar f32 loss.

    features: [bsz, n_views, ...]; labels: optional [bsz]; mask: optional
    [bsz, bsz].  `matmul_dtype` feeds the MXU (default bf16 with f32
    accumulation); pass jnp.float32 for full-precision scores.
    """
    if features.ndim < 3:
        raise ValueError("`features` needs to be [bsz, n_views, ...], "
                         "at least 3 dimensions are required")
    if labels is not None and mask is not None:
        raise ValueError("Cannot define both `labels` and `mask`")

    bsz, n_views = features.shape[0], features.shape[1]
    feats = features.reshape(bsz, n_views, -1)
    d = feats.shape[-1]

    # contrast_feature = cat(unbind(features, dim=1), dim=0)  (view-major [N, D])
    contrast = jnp.concatenate([feats[:, v] for v in range(n_views)], axis=0)
    contrast_count = n_views
    if contrast_mode == "one":
        anchor, anchor_count = feats[:, 0], 1
    elif contrast_mode == "all":
        anchor, anchor_count = contrast, contrast_count
    else:
        raise ValueError(f"Unknown mode: {contrast_mode}")

    n_rows = bsz * contrast_count
    a_rows = bsz * anchor_count

    cdt = jnp.dtype(matmul_dtype)
    d_pad = _round_up(d, 128)
    budget, vmem_limit = _vmem_budget_and_limit()
    if _debug_tiles is not None:
        tile_rows, tile_n = _debug_tiles
        n_pad = _round_up(n_rows, tile_n)
    else:
        tile_rows, tile_n, n_pad = _choose_tiles(
            a_rows, n_rows, d_pad, cdt.itemsize, budget, mask is not None)
    a_pad = _round_up(a_rows, tile_rows)
    num_a, num_k = a_pad // tile_rows, n_pad // tile_n
    resident = num_k == 1
    grid = (num_a, num_k)

    anchor_p = jnp.pad(anchor.astype(cdt),
                       ((0, a_pad - a_rows), (0, d_pad - d)))
    # Pre-transposed contrast [D, N]: MXU-friendly layout; padded columns are
    # masked in-kernel via `col < n_valid`.
    contrast_p = jnp.pad(contrast.astype(cdt).T,
                         ((0, d_pad - d), (0, n_pad - n_rows)))

    inv_temp = 1.0 / float(temperature)
    loss_scale = -(float(temperature) / float(base_temperature))
    kw = dict(n_valid=n_rows, tile_rows=tile_rows, tile_n=tile_n,
              inv_temp=inv_temp, loss_scale=loss_scale)

    contrast_spec = _block_spec((d_pad, tile_n), lambda i, k: (0, k),
                                n_buffers=1 if resident else None)
    anchor_spec = pl.BlockSpec((tile_rows, d_pad), lambda i, k: (i, 0))
    out_spec = pl.BlockSpec((1, tile_rows), lambda i, k: (i, 0))
    out_shape = jax.ShapeDtypeStruct((num_a, tile_rows), jnp.float32)
    scratch = [pltpu.VMEM((tile_rows, 1), jnp.float32) for _ in range(3)]
    cparams = pltpu.CompilerParams(
        dimension_semantics=("parallel", "arbitrary"),
        vmem_limit_bytes=vmem_limit)

    if mask is None:
        # Labels path (SimCLR default == labels = arange): positives built
        # in-kernel from a [TA,1] anchor-label column vs a [1,TN] contrast row.
        if labels is None:
            labels_vec = jnp.arange(bsz, dtype=jnp.int32)
        else:
            labels_vec = jnp.asarray(labels).reshape(-1).astype(jnp.int32)
            if labels_vec.shape[0] != bsz:
                raise ValueError("Num of labels does not match num of features")

        same_cnt = jnp.sum(
            (labels_vec[:, None] == labels_vec[None, :]).astype(jnp.int32), axis=1)
        pcnt = jnp.tile(same_cnt * contrast_count - 1, anchor_count)   # int [A]
        alab = jnp.tile(labels_vec, anchor_count)                      # int [A]
        clab = jnp.tile(labels_vec, contrast_count)                    # int [N]

        side_p = jnp.pad(jnp.stack([alab, pcnt], axis=1),
                         ((0, a_pad - a_rows), (0, 0)))                # [A_pad, 2]
        clab_p = jnp.pad(clab, (0, n_pad - n_rows),
                         constant_values=-1)[None, :]                  # [1, N_pad]

        kernel = functools.partial(_supcon_labels_kernel, **kw)
        out = pl.pallas_call(
            kernel,
            out_shape=out_shape,
            grid=grid,
            in_specs=[
                pl.BlockSpec((tile_rows, 2), lambda i, k: (i, 0)),     # label+count
                _block_spec((1, tile_n), lambda i, k: (0, k),
                            n_buffers=1 if resident else None),        # contrast labels
                anchor_spec,
                contrast_spec,
            ],
            out_specs=out_spec,
            scratch_shapes=scratch,
            compiler_params=cparams,
        )(side_p, clab_p, anchor_p, contrast_p)
    else:
        # Arbitrary-mask fallback: no label factorization exists, so stream the
        # tiled positive-weight blocks (kept f32 to preserve arbitrary weights).
        base = jnp.asarray(mask).astype(jnp.float32)
        big = jnp.tile(base, (anchor_count, contrast_count))           # [A, N]
        not_self = (jnp.arange(n_rows)[None, :] != jnp.arange(a_rows)[:, None])
        pcnt = jnp.sum(big * not_self, axis=1)                         # [A] f32
        big_p = jnp.pad(big, ((0, a_pad - a_rows), (0, n_pad - n_rows)))
        pcnt_p = jnp.pad(pcnt, (0, a_pad - a_rows))[:, None]

        kernel = functools.partial(_supcon_mask_kernel, **kw)
        out = pl.pallas_call(
            kernel,
            out_shape=out_shape,
            grid=grid,
            in_specs=[
                pl.BlockSpec((tile_rows, 1), lambda i, k: (i, 0)),     # positive count
                pl.BlockSpec((tile_rows, tile_n), lambda i, k: (i, k)),  # pos weights
                anchor_spec,
                contrast_spec,
            ],
            out_specs=out_spec,
            scratch_shapes=scratch,
            compiler_params=cparams,
        )(pcnt_p, big_p, anchor_p, contrast_p)

    # loss.view(anchor_count, batch_size).mean() == mean over all A anchor rows.
    return jnp.mean(out.reshape(-1)[:a_rows])


# ---------------------------------------------------------------------------
# Pure-JAX reference (mirrors the PyTorch module, forward only)
# ---------------------------------------------------------------------------

def _supcon_loss_ref(features, labels=None, mask=None, *, temperature=0.07,
                     contrast_mode="all", base_temperature=0.07,
                     matmul_dtype=jnp.float32):
    bsz, n_views = features.shape[0], features.shape[1]
    feats = features.reshape(bsz, n_views, -1).astype(jnp.float32)
    if labels is None and mask is None:
        base = jnp.eye(bsz, dtype=jnp.float32)
    elif labels is not None:
        l = jnp.asarray(labels).reshape(-1, 1)
        base = (l == l.T).astype(jnp.float32)
    else:
        base = jnp.asarray(mask).astype(jnp.float32)
    contrast = jnp.concatenate([feats[:, v] for v in range(n_views)], axis=0)
    if contrast_mode == "one":
        anchor, anchor_count = feats[:, 0], 1
    else:
        anchor, anchor_count = contrast, n_views
    A, N = bsz * anchor_count, bsz * n_views
    mm_dt = jnp.dtype(matmul_dtype)
    s = jnp.matmul(anchor.astype(mm_dt), contrast.astype(mm_dt).T,
                   preferred_element_type=jnp.float32) / temperature
    s = s - jnp.max(s, axis=1, keepdims=True)
    big = jnp.tile(base, (anchor_count, n_views))
    lmask = (jnp.arange(N)[None, :] != jnp.arange(A)[:, None]).astype(jnp.float32)
    pos = big * lmask
    exp_s = jnp.exp(s) * lmask
    log_prob = s - jnp.log(jnp.sum(exp_s, axis=1, keepdims=True))
    mlpp = jnp.sum(pos * log_prob, axis=1) / jnp.sum(pos, axis=1)
    return jnp.mean(-(temperature / base_temperature) * mlpp)


if __name__ == "__main__":
    k1, k2, k3, k4 = jax.random.split(jax.random.PRNGKey(0), 4)
    bsz, n_views, feat_dim = 8, 2, 64
    features = jax.random.normal(k1, (bsz, n_views, feat_dim), jnp.float32)
    features = features / jnp.linalg.norm(features, axis=-1, keepdims=True)
    labels = jax.random.randint(k2, (bsz,), 0, 3)

    # 1) SimCLR default path (no labels / mask), f32 MXU feed.
    out = jax.block_until_ready(supcon_loss(features, matmul_dtype=jnp.float32))
    ref = _supcon_loss_ref(features, matmul_dtype=jnp.float32)
    assert jnp.allclose(out, ref, rtol=2e-3, atol=2e-3), (out, ref)

    # 2) Supervised (labels) path, f32.
    out = jax.block_until_ready(
        supcon_loss(features, labels=labels, matmul_dtype=jnp.float32))
    ref = _supcon_loss_ref(features, labels=labels, matmul_dtype=jnp.float32)
    assert jnp.allclose(out, ref, rtol=2e-3, atol=2e-3), (out, ref)

    # 3) Default bf16 MXU feed (f32 accumulation).
    out = jax.block_until_ready(supcon_loss(features, labels=labels))
    ref = _supcon_loss_ref(features, labels=labels, matmul_dtype=jnp.bfloat16)
    assert jnp.allclose(out, ref, rtol=2e-2, atol=2e-2), (out, ref)

    # 4) Explicit-mask fallback path, f32.
    base_mask = (labels[:, None] == labels[None, :]).astype(jnp.float32)
    out = jax.block_until_ready(
        supcon_loss(features, mask=base_mask, matmul_dtype=jnp.float32))
    ref = _supcon_loss_ref(features, mask=base_mask, matmul_dtype=jnp.float32)
    assert jnp.allclose(out, ref, rtol=2e-3, atol=2e-3), (out, ref)

    # 5) contrast_mode='one', f32.
    out = jax.block_until_ready(
        supcon_loss(features, labels=labels, contrast_mode="one",
                    matmul_dtype=jnp.float32))
    ref = _supcon_loss_ref(features, labels=labels, contrast_mode="one",
                           matmul_dtype=jnp.float32)
    assert jnp.allclose(out, ref, rtol=2e-3, atol=2e-3), (out, ref)

    # 6) Exercise the contrast-tiled online-softmax path (num_k > 1).
    big_b = 96
    f2 = jax.random.normal(k3, (big_b, 2, 32), jnp.float32)
    f2 = f2 / jnp.linalg.norm(f2, axis=-1, keepdims=True)
    l2 = jax.random.randint(k4, (big_b,), 0, 5)
    out = jax.block_until_ready(
        supcon_loss(f2, labels=l2, matmul_dtype=jnp.float32,
                    _debug_tiles=(64, 128)))
    ref = _supcon_loss_ref(f2, labels=l2, matmul_dtype=jnp.float32)
    assert jnp.allclose(out, ref, rtol=2e-3, atol=2e-3), (out, ref)

    print("KERNEL_OK")
</pallas_src>

<mosaic_0001>
module attributes {stable_mosaic.version = 11 : i64} {
  func.func @_supcon_labels_kernel(%arg0: i32, %arg1: i32, %arg2: memref<16x2xi32, #tpu.memory_space<vmem>>, %arg3: memref<1x128xi32, #tpu.memory_space<vmem>>, %arg4: memref<16x128xf32, #tpu.memory_space<vmem>>, %arg5: memref<128x128xf32, #tpu.memory_space<vmem>>, %arg6: memref<1x16xf32, #tpu.memory_space<vmem>>, %arg7: memref<16x1xf32, #tpu.memory_space<vmem>>, %arg8: memref<16x1xf32, #tpu.memory_space<vmem>>, %arg9: memref<16x1xf32, #tpu.memory_space<vmem>>) attributes {dimension_semantics = [#tpu.dimension_semantics<parallel>, #tpu.dimension_semantics<arbitrary>], iteration_bounds = array<i64: 1, 1>, scalar_prefetch = 0 : i64, scratch_operands = 3 : i64, tpu.core_type = #tpu.core_type<tc>, window_params = [{transform_indices = @transform_0, window_bounds = array<i64: 16, 2>}, {pipeline_mode = #tpu.pipeline_mode<synchronous>, transform_indices = @transform_1, window_bounds = array<i64: 1, 128>}, {transform_indices = @transform_2, window_bounds = array<i64: 16, 128>}, {pipeline_mode = #tpu.pipeline_mode<synchronous>, transform_indices = @transform_3, window_bounds = array<i64: 128, 128>}, {transform_indices = @transform_4, window_bounds = array<i64: 1, 16>}]} {
    %c0_i32 = arith.constant 0 : i32
    %0 = arith.cmpi eq, %arg1, %c0_i32 : i32
    %1 = arith.extui %0 : i1 to i32
    %c0_i32_0 = arith.constant 0 : i32
    %2 = arith.cmpi ne, %1, %c0_i32_0 : i32
    scf.if %2 {
      %cst_32 = arith.constant -1.000000e+30 : f32
      %57 = vector.broadcast %cst_32 : f32 to vector<16x1xf32>
      %c0_33 = arith.constant 0 : index
      %c0_34 = arith.constant 0 : index
      %58 = vector.load %arg7[%c0_33, %c0_34] : memref<16x1xf32, #tpu.memory_space<vmem>>, vector<16x1xf32>
      tpu.vector_store %arg7[%c0_33, %c0_34], %57 {strides = array<i32>} : memref<16x1xf32, #tpu.memory_space<vmem>>, vector<16x1xf32>,
      %cst_35 = arith.constant 0.000000e+00 : f32
      %59 = vector.broadcast %cst_35 : f32 to vector<16x1xf32>
      %c0_36 = arith.constant 0 : index
      %c0_37 = arith.constant 0 : index
      %60 = vector.load %arg8[%c0_36, %c0_37] : memref<16x1xf32, #tpu.memory_space<vmem>>, vector<16x1xf32>
      tpu.vector_store %arg8[%c0_36, %c0_37], %59 {strides = array<i32>} : memref<16x1xf32, #tpu.memory_space<vmem>>, vector<16x1xf32>,
      %cst_38 = arith.constant 0.000000e+00 : f32
      %61 = vector.broadcast %cst_38 : f32 to vector<16x1xf32>
      %c0_39 = arith.constant 0 : index
      %c0_40 = arith.constant 0 : index
      %62 = vector.load %arg9[%c0_39, %c0_40] : memref<16x1xf32, #tpu.memory_space<vmem>>, vector<16x1xf32>
      tpu.vector_store %arg9[%c0_39, %c0_40], %61 {strides = array<i32>} : memref<16x1xf32, #tpu.memory_space<vmem>>, vector<16x1xf32>,
    } else {
    }
    %c0 = arith.constant 0 : index
    %c0_1 = arith.constant 0 : index
    %3 = vector.load %arg4[%c0, %c0_1] : memref<16x128xf32, #tpu.memory_space<vmem>>, vector<16x128xf32>
    %c0_2 = arith.constant 0 : index
    %c0_3 = arith.constant 0 : index
    %4 = vector.load %arg5[%c0_2, %c0_3] : memref<128x128xf32, #tpu.memory_space<vmem>>, vector<128x128xf32>
    %cst = arith.constant dense<0.000000e+00> : vector<16x128xf32>
    %5 = tpu.matmul %3, %4, %cst {dimension_numbers = #tpu.dot_dimension_numbers<[1], [0], [0], [1], [0, 0, 1, 1], [], []>} : vector<16x128xf32>, vector<128x128xf32>, vector<16x128xf32> -> vector<16x128xf32>
    %cst_4 = arith.constant 14.2857141 : f32
    %6 = vector.broadcast %cst_4 : f32 to vector<16x128xf32>
    %7 = arith.mulf %5, %6 : vector<16x128xf32>
    %8 = tpu.iota {dimensions = array<i32: 0>} : vector<16x128xi32>
    %c16_i32 = arith.constant 16 : i32
    %9 = arith.muli %arg0, %c16_i32 : i32
    %10 = vector.broadcast %9 : i32 to vector<16x128xi32>
    %11 = arith.addi %8, %10 : vector<16x128xi32>
    %12 = tpu.iota {dimensions = array<i32: 1>} : vector<16x128xi32>
    %c128_i32 = arith.constant 128 : i32
    %13 = arith.muli %arg1, %c128_i32 : i32
    %14 = vector.broadcast %13 : i32 to vector<16x128xi32>
    %15 = arith.addi %12, %14 : vector<16x128xi32>
    %c16_i32_5 = arith.constant 16 : i32
    %16 = vector.broadcast %c16_i32_5 : i32 to vector<16x128xi32>
    %17 = arith.cmpi slt, %15, %16 : vector<16x128xi32>
    %18 = arith.cmpi ne, %15, %11 : vector<16x128xi32>
    %19 = arith.andi %17, %18 : vector<16x128xi1>
    %cst_6 = arith.constant -1.000000e+30 : f32
    %20 = vector.broadcast %cst_6 : f32 to vector<16x128xf32>
    %21 = arith.select %19, %7, %20 : vector<16x128xi1>, vector<16x128xf32>
    %c0_7 = arith.constant 0 : index
    %c0_8 = arith.constant 0 : index
    %22 = vector.load %arg7[%c0_7, %c0_8] : memref<16x1xf32, #tpu.memory_space<vmem>>, vector<16x1xf32>
    %cst_9 = arith.constant dense<0xFF800000> : vector<16xf32>
    %23 = vector.multi_reduction <maximumf>, %21, %cst_9 [1] : vector<16x128xf32> to vector<16xf32>
    %24 = vector.shape_cast %23 : vector<16xf32> to vector<16x1xf32>
    %25 = arith.maximumf %22, %24 : vector<16x1xf32>
    %c0_10 = arith.constant 0 : index
    %c0_11 = arith.constant 0 : index
    %26 = vector.load %arg8[%c0_10, %c0_11] : memref<16x1xf32, #tpu.memory_space<vmem>>, vector<16x1xf32>
    %c0_12 = arith.constant 0 : index
    %c0_13 = arith.constant 0 : index
    %27 = vector.load %arg7[%c0_12, %c0_13] : memref<16x1xf32, #tpu.memory_space<vmem>>, vector<16x1xf32>
    %28 = arith.subf %27, %25 : vector<16x1xf32>
    %29 = math.exp %28 : vector<16x1xf32>
    %30 = arith.mulf %26, %29 : vector<16x1xf32>
    %31 = vector.broadcast %25 : vector<16x1xf32> to vector<16x128xf32>
    %32 = arith.subf %21, %31 : vector<16x128xf32>
    %33 = math.exp %32 : vector<16x128xf32>
    %cst_14 = arith.constant dense<0.000000e+00> : vector<16xf32>
    %34 = vector.multi_reduction <add>, %33, %cst_14 [1] : vector<16x128xf32> to vector<16xf32>
    %35 = vector.shape_cast %34 : vector<16xf32> to vector<16x1xf32>
    %36 = arith.addf %30, %35 : vector<16x1xf32>
    %c0_15 = arith.constant 0 : index
    %c0_16 = arith.constant 0 : index
    %37 = vector.load %arg8[%c0_15, %c0_16] : memref<16x1xf32, #tpu.memory_space<vmem>>, vector<16x1xf32>
    tpu.vector_store %arg8[%c0_15, %c0_16], %36 {strides = array<i32>} : memref<16x1xf32, #tpu.memory_space<vmem>>, vector<16x1xf32>,
    %c0_17 = arith.constant 0 : index
    %c0_18 = arith.constant 0 : index
    %38 = vector.load %arg7[%c0_17, %c0_18] : memref<16x1xf32, #tpu.memory_space<vmem>>, vector<16x1xf32>
    tpu.vector_store %arg7[%c0_17, %c0_18], %25 {strides = array<i32>} : memref<16x1xf32, #tpu.memory_space<vmem>>, vector<16x1xf32>,
    %c0_19 = arith.constant 0 : index
    %c0_20 = arith.constant 0 : index
    %39 = vector.load %arg9[%c0_19, %c0_20] : memref<16x1xf32, #tpu.memory_space<vmem>>, vector<16x1xf32>
    %c0_21 = arith.constant 0 : index
    %c0_22 = arith.constant 0 : index
    %40 = vector.load %arg2[%c0_21, %c0_22] : memref<16x2xi32, #tpu.memory_space<vmem>>, vector<16x1xi32>
    %c0_23 = arith.constant 0 : index
    %c0_24 = arith.constant 0 : index
    %41 = vector.load %arg3[%c0_23, %c0_24] : memref<1x128xi32, #tpu.memory_space<vmem>>, vector<1x128xi32>
    %42 = vector.broadcast %40 : vector<16x1xi32> to vector<16x128xi32>
    %43 = vector.broadcast %41 : vector<1x128xi32> to vector<16x128xi32>
    %44 = arith.cmpi eq, %42, %43 : vector<16x128xi32>
    %45 = arith.andi %44, %19 : vector<16x128xi1>
    %cst_25 = arith.constant 1.000000e+00 : f32
    %cst_26 = arith.constant 0.000000e+00 : f32
    %46 = vector.broadcast %cst_25 : f32 to vector<16x128xf32>
    %47 = vector.broadcast %cst_26 : f32 to vector<16x128xf32>
    %48 = arith.select %45, %46, %47 : vector<16x128xi1>, vector<16x128xf32>
    %49 = arith.mulf %48, %7 : vector<16x128xf32>
    %cst_27 = arith.constant dense<0.000000e+00> : vector<16xf32>
    %50 = vector.multi_reduction <add>, %49, %cst_27 [1] : vector<16x128xf32> to vector<16xf32>
    %51 = vector.shape_cast %50 : vector<16xf32> to vector<16x1xf32>
    %52 = arith.addf %39, %51 : vector<16x1xf32>
    %c0_28 = arith.constant 0 : index
    %c0_29 = arith.constant 0 : index
    %53 = vector.load %arg9[%c0_28, %c0_29] : memref<16x1xf32, #tpu.memory_space<vmem>>, vector<16x1xf32>
    tpu.vector_store %arg9[%c0_28, %c0_29], %52 {strides = array<i32>} : memref<16x1xf32, #tpu.memory_space<vmem>>, vector<16x1xf32>,
    %c0_i32_30 = arith.constant 0 : i32
    %54 = arith.cmpi eq, %arg1, %c0_i32_30 : i32
    %55 = arith.extui %54 : i1 to i32
    %c0_i32_31 = arith.constant 0 : i32
    %56 = arith.cmpi ne, %55, %c0_i32_31 : i32
    scf.if %56 {
      %c0_32 = arith.constant 0 : index
      %c1 = arith.constant 1 : index
      %57 = vector.load %arg2[%c0_32, %c1] : memref<16x2xi32, #tpu.memory_space<vmem>>, vector<16x1xi32>
      %58 = arith.sitofp %57 : vector<16x1xi32> to vector<16x1xf32>
      %c0_33 = arith.constant 0 : index
      %c0_34 = arith.constant 0 : index
      %59 = vector.load %arg7[%c0_33, %c0_34] : memref<16x1xf32, #tpu.memory_space<vmem>>, vector<16x1xf32>
      %c0_35 = arith.constant 0 : index
      %c0_36 = arith.constant 0 : index
      %60 = vector.load %arg8[%c0_35, %c0_36] : memref<16x1xf32, #tpu.memory_space<vmem>>, vector<16x1xf32>
      %61 = math.log %60 : vector<16x1xf32>
      %62 = arith.addf %59, %61 : vector<16x1xf32>
      %cst_37 = arith.constant 0.000000e+00 : f32
      %63 = vector.broadcast %cst_37 : f32 to vector<16x1xf32>
      %64 = arith.cmpf ogt, %58, %63 : vector<16x1xf32>
      %c0_38 = arith.constant 0 : index
      %c0_39 = arith.constant 0 : index
      %65 = vector.load %arg9[%c0_38, %c0_39] : memref<16x1xf32, #tpu.memory_space<vmem>>, vector<16x1xf32>
      %66 = arith.mulf %62, %58 : vector<16x1xf32>
      %67 = arith.subf %65, %66 : vector<16x1xf32>
      %cst_40 = arith.constant 1.000000e+00 : f32
      %68 = vector.broadcast %cst_40 : f32 to vector<16x1xf32>
      %69 = arith.maximumf %58, %68 : vector<16x1xf32>
      %70 = arith.divf %67, %69 : vector<16x1xf32>
      %cst_41 = arith.constant 0.000000e+00 : f32
      %71 = vector.broadcast %cst_41 : f32 to vector<16x1xf32>
      %72 = arith.select %64, %70, %71 : vector<16x1xi1>, vector<16x1xf32>
      %cst_42 = arith.constant -1.000000e+00 : f32
      %73 = vector.broadcast %cst_42 : f32 to vector<16x1xf32>
      %74 = arith.mulf %73, %72 : vector<16x1xf32>
      %75 = vector.shape_cast %74 : vector<16x1xf32> to vector<1x16xf32>
      %c0_43 = arith.constant 0 : index
      %c0_44 = arith.constant 0 : index
      %76 = vector.load %arg6[%c0_43, %c0_44] : memref<1x16xf32, #tpu.memory_space<vmem>>, vector<1x16xf32>
      tpu.vector_store %arg6[%c0_43, %c0_44], %75 {strides = array<i32>} : memref<1x16xf32, #tpu.memory_space<vmem>>, vector<1x16xf32>,
    } else {
    }
    return
  }
  func.func @transform_0(%arg0: i32, %arg1: i32) -> (i32, i32) {
    %c0_i32 = arith.constant 0 : i32
    %c0_i32_0 = arith.constant 0 : i32
    return %arg0, %c0_i32 : i32, i32
  }
  func.func @transform_1(%arg0: i32, %arg1: i32) -> (i32, i32) {
    %c0_i32 = arith.constant 0 : i32
    %c0_i32_0 = arith.constant 0 : i32
    return %c0_i32, %arg1 : i32, i32
  }
  func.func @transform_2(%arg0: i32, %arg1: i32) -> (i32, i32) {
    %c0_i32 = arith.constant 0 : i32
    %c0_i32_0 = arith.constant 0 : i32
    return %arg0, %c0_i32 : i32, i32
  }
  func.func @transform_3(%arg0: i32, %arg1: i32) -> (i32, i32) {
    %c0_i32 = arith.constant 0 : i32
    %c0_i32_0 = arith.constant 0 : i32
    return %c0_i32, %arg1 : i32, i32
  }
  func.func @transform_4(%arg0: i32, %arg1: i32) -> (i32, i32) {
    %c0_i32 = arith.constant 0 : i32
    %c0_i32_0 = arith.constant 0 : i32
    return %arg0, %c0_i32 : i32, i32
  }
}

</mosaic_0001>

<llo_original>
// kernel: tpu_custom_call.1
$region0: #{tpu_custom_call.1}
  #allocation0 [shape = 'u32[]', space=smem, size = 0x4, offset = 0x4, fixed_abs, tag = 'smem constant byte address 0x4 - core index']
  #allocation1 [shape = 'u32[144,128]{1,0:T(1,128)}', space=vmem, size = 0x12000, scoped, tag = 'internal scratch']
  #allocation2 [shape = 'f32[16,1]{1,0:T(8,128)}', space=vmem, size = 0x2000, scoped, tag = 'scratch operand']
  #allocation3 [shape = 'f32[16,1]{1,0:T(8,128)}', space=vmem, size = 0x2000, scoped, tag = 'scratch operand']
  #allocation4 [shape = 'f32[16,1]{1,0:T(8,128)}', space=vmem, size = 0x2000, scoped, tag = 'scratch operand']
  %s0 = inlined_call_operand.vmem [shape: s32[16,2], index: 0, kind: input, shape index: {}]
  %s1 = inlined_call_operand.vmem [shape: s32[1,128], index: 1, kind: input, shape index: {}]
  %s2 = inlined_call_operand.vmem [shape: f32[16,128], index: 2, kind: input, shape index: {}]
  %s3 = inlined_call_operand.hbm [shape: f32[128,128], index: 3, kind: input, shape index: {}]
  %s4 = inlined_call_operand.hbm [shape: f32[1,16], index: 4, kind: output, shape index: {}]
  %s5 = sld [smem:[#allocation0]]
  $region38: #{tpu_custom_call.1} parent=0
    _
  %s7 = ssub.s32 1, %s5
  %s8 = scalar_select 0, %s7, %s5
  $region1: #{tpu_custom_call.1} parent=0
    #allocation5 [shape = 'u8[65536]{0}', space=vmem, size = 0x10000, scoped, tag = 'input window, operand 3, single buffered']
    #allocation6 [shape = 's32[1]{0}', space=sflag, size = 0x4, scoped, tag = 'scoped memory for tpu_custom_call.1']
    #allocation7 [shape = 's32[1]{0}', space=sflag, size = 0x4, scoped, tag = 'scoped memory for tpu_custom_call.1']
    #allocation8 [shape = 'u8[512]{0}', space=vmem, size = 0x400, scoped, tag = 'output window, operand 0, single buffered']
    %9 = vsyncpa [#allocation6], 0
    %10 = vsyncpa [#allocation7], 0
    // Predicated region
    $region2: #{tpu_custom_call.1} parent=1 // pred_check
      _
    $region3: #{tpu_custom_call.1} parent=1 // pred_check_branch
      %12 = sbr.rel (0) target = $region5
    $region4: #{tpu_custom_call.1} parent=1 // pred_region
      _
    $region5: #{tpu_custom_call.1} parent=1 // pred_fallthru
      _
    // Predicated region
    $region6: #{tpu_custom_call.1} parent=1 // pred_check
      _
    $region7: #{tpu_custom_call.1} parent=1 // pred_check_branch
      %14 = sbr.rel (0) target = $region9
    $region8: #{tpu_custom_call.1} parent=1 // pred_region
      _
    $region9: #{tpu_custom_call.1} parent=1 // pred_fallthru
      _
    // Predicated region
    $region10: #{tpu_custom_call.1} parent=1 // pred_check
      _
    $region11: #{tpu_custom_call.1} parent=1 // pred_check_branch
      %16 = sbr.rel (0) target = $region13
    $region12: #{tpu_custom_call.1} parent=1 // pred_region
      _
    $region13: #{tpu_custom_call.1} parent=1 // pred_fallthru
      _
    // Predicated region
    $region14: #{tpu_custom_call.1} parent=1 // pred_check
      _
    $region15: #{tpu_custom_call.1} parent=1 // pred_check_branch
      %18 = sbr.rel (0) target = $region17
    $region16: #{tpu_custom_call.1} parent=1 // pred_region
      %s20 = ssub.s32 2048, 2048
      %21 = vsyncadd [#allocation6], %s20
      %s22 = sshll.u32 [#allocation5], 4
      %s23 = int_to_ptr.vmem [resolvable:$true] %s22
      %28 = dma.hbm_to_vmem [thread:$0]  %s3, 2048, %s23, [#allocation6], 128, 128, 8
    $region17: #{tpu_custom_call.1} parent=1 // pred_fallthru
      _
    // Predicated region
    $region18: #{tpu_custom_call.1} parent=1 // pred_check
      _
    $region19: #{tpu_custom_call.1} parent=1 // pred_check_branch
      %30 = sbr.rel (0) target = $region21
    $region20: #{tpu_custom_call.1} parent=1 // pred_region
      %31 = dma.done [#allocation6], 2048
    $region21: #{tpu_custom_call.1} parent=1 // pred_fallthru
      _
    %p32 = scmp.eq.s32.totalorder 0, 0
    // Predicated region
    $region22: #{tpu_custom_call.1} parent=1 // pred_check
      %p33 = pneg %p32
    $region23: #{tpu_custom_call.1} parent=1 // pred_check_branch
      %35 = sbr.rel (%p33) target = $region25
    $region24: #{tpu_custom_call.1} parent=1 // pred_region
      %vm36 = vcmask 7168
      %37 = vst.msk [vmem:[#allocation2] sm:$0xff] %vm36, -1e+30
      %38 = vst.msk [vmem:[#allocation2 + $0x8] sm:$0xff] %vm36, -1e+30
      %39 = vst.msk [vmem:[#allocation3] sm:$0xff] %vm36, 0.0
      %40 = vst.msk [vmem:[#allocation3 + $0x8] sm:$0xff] %vm36, 0.0
      %41 = vst.msk [vmem:[#allocation4] sm:$0xff] %vm36, 0.0
      %42 = vst.msk [vmem:[#allocation4 + $0x8] sm:$0xff] %vm36, 0.0
    $region25: #{tpu_custom_call.1} parent=1 // pred_fallthru
      _
    %v43 = vld [vmem:[%s2] sm:$0xff]
    %v44 = vld [vmem:[%s2 + $0x8] sm:$0xff]
    %v45 = vld [vmem:[#allocation5] sm:$0xff]
    %v46 = vld [vmem:[#allocation5 + $0x8] sm:$0xff]
    %v47 = vld [vmem:[#allocation5 + $0x10] sm:$0xff]
    %v48 = vld [vmem:[#allocation5 + $0x18] sm:$0xff]
    %v49 = vld [vmem:[#allocation5 + $0x20] sm:$0xff]
    %v50 = vld [vmem:[#allocation5 + $0x28] sm:$0xff]
    %v51 = vld [vmem:[#allocation5 + $0x30] sm:$0xff]
    %v52 = vld [vmem:[#allocation5 + $0x38] sm:$0xff]
    %v53 = vld [vmem:[#allocation5 + $0x40] sm:$0xff]
    %v54 = vld [vmem:[#allocation5 + $0x48] sm:$0xff]
    %v55 = vld [vmem:[#allocation5 + $0x50] sm:$0xff]
    %v56 = vld [vmem:[#allocation5 + $0x58] sm:$0xff]
    %v57 = vld [vmem:[#allocation5 + $0x60] sm:$0xff]
    %v58 = vld [vmem:[#allocation5 + $0x68] sm:$0xff]
    %v59 = vld [vmem:[#allocation5 + $0x70] sm:$0xff]
    %v60 = vld [vmem:[#allocation5 + $0x78] sm:$0xff]
    %61 = vmatprep.subr.mxu0 0.0
    %62 = vmatpush1.msra.mxu0 %v45
    %63 = vmatprep.subr.mxu0 0.0
    %64 = vmatpush1.msra.mxu0 %v46
    %65 = vmatprep.subr.mxu0 0.0
    %66 = vmatpush1.msra.mxu0 %v47
    %67 = vmatprep.subr.mxu0 0.0
    %68 = vmatpush1.msra.mxu0 %v48
    %69 = vmatprep.subr.mxu0 0.0
    %70 = vmatpush1.msra.mxu0 %v49
    %71 = vmatprep.subr.mxu0 0.0
    %72 = vmatpush1.msra.mxu0 %v50
    %73 = vmatprep.subr.mxu0 0.0
    %74 = vmatpush1.msra.mxu0 %v51
    %75 = vmatprep.subr.mxu0 0.0
    %76 = vmatpush1.msra.mxu0 %v52
    %77 = vmatprep.subr.mxu0 0.0
    %78 = vmatpush1.msra.mxu0 %v53
    %79 = vmatprep.subr.mxu0 0.0
    %80 = vmatpush1.msra.mxu0 %v54
    %81 = vmatprep.subr.mxu0 0.0
    %82 = vmatpush1.msra.mxu0 %v55
    %83 = vmatprep.subr.mxu0 0.0
    %84 = vmatpush1.msra.mxu0 %v56
    %85 = vmatprep.subr.mxu0 0.0
    %86 = vmatpush1.msra.mxu0 %v57
    %87 = vmatprep.subr.mxu0 0.0
    %88 = vmatpush1.msra.mxu0 %v58
    %89 = vmatprep.subr.mxu0 0.0
    %90 = vmatpush1.msra.mxu0 %v59
    %91 = vmatprep.subr.mxu0 0.0
    %92 = vmatpush1.msra.mxu0 %v60
    %93 = vmatprep.subr.mxu0 0.0
    %94 = vmatpush1.msra.mxu0 0.0
    %95 = vmatprep.subr.mxu0 0.0
    %96 = vmatpush1.msra.mxu0 0.0
    %97 = vmatprep.subr.mxu0 0.0
    %98 = vmatpush1.msra.mxu0 0.0
    %99 = vmatprep.subr.mxu0 0.0
    %100 = vmatpush1.msra.mxu0 0.0
    %101 = vmatprep.subr.mxu0 0.0
    %102 = vmatpush1.msra.mxu0 0.0
    %103 = vmatprep.subr.mxu0 0.0
    %104 = vmatpush1.msra.mxu0 0.0
    %105 = vmatprep.subr.mxu0 0.0
    %106 = vmatpush1.msra.mxu0 0.0
    %107 = vmatprep.subr.mxu0 0.0
    %108 = vmatpush1.msra.mxu0 0.0
    %109 = vmatprep.subr.mxu0 0.0
    %110 = vmatpush1.msra.mxu0 0.0
    %111 = vmatprep.subr.mxu0 0.0
    %112 = vmatpush1.msra.mxu0 0.0
    %113 = vmatprep.subr.mxu0 0.0
    %114 = vmatpush1.msra.mxu0 0.0
    %115 = vmatprep.subr.mxu0 0.0
    %116 = vmatpush1.msra.mxu0 0.0
    %117 = vmatprep.subr.mxu0 0.0
    %118 = vmatpush1.msra.mxu0 0.0
    %119 = vmatprep.subr.mxu0 0.0
    %120 = vmatpush1.msra.mxu0 0.0
    %121 = vmatprep.subr.mxu0 0.0
    %122 = vmatpush1.msra.mxu0 0.0
    %123 = vmatprep.subr.mxu0 0.0
    %124 = vmatpush1.msra.mxu0 0.0
    %125 = vmatprep.mubr.f32.mxu0 0.0
    %126 = vmatmul.mubr.f32.gmra.mrb[0].mxu0 %v43
    %v127 = vpop.f32.mrb[0].mxu0
    %v128 = vadd.f32 0.0, %v127
    %v129 = vpop.f32.mrb[0].mxu0
    %130 = vmatprep.mubr.f32.mxu0 0.0
    %131 = vmatmul.mubr.f32.gmra.mrb[0].mxu0 %v44
    %v132 = vpop.f32.mrb[0].mxu0
    %v133 = vadd.f32 0.0, %v132
    %v134 = vpop.f32.mrb[0].mxu0
    %135 = vdwg.mxu0
    %v136 = vmul.f32 %v128, 14.285714
    %v137 = vmul.f32 %v133, 14.285714
    %v138 = vlaneseq
    %v139 = vshrl.u32 %v138, 7
    %v140 = vadd.s32 %v139, 8
    %s141 = smul.u32 0, 16
    %v142 = vstv %s141
    %v143 = vadd.s32 %v139, %v142
    %v144 = vadd.s32 %v140, %v142
    %v145 = vlaneseq
    %v146 = vand.u32 %v145, 127
    %s147 = smul.u32 0, 128
    %v148 = vstv %s147
    %v149 = vadd.s32 %v146, %v148
    %vm150 = vcmp.lt.s32.totalorder %v149, 16
    %vm151 = vcmp.ne.s32.totalorder %v149, %v143
    %vm152 = vcmp.ne.s32.totalorder %v149, %v144
    %vm153 = vmand %vm150, %vm151
    %vm154 = vmand %vm150, %vm152
    %v155 = vsel %vm153, %v136, -1e+30
    %v156 = vsel %vm154, %v137, -1e+30
    %v157 = vld [vmem:[#allocation2] sm:$0xff]
    %v158 = vld [vmem:[#allocation2 + $0x8] sm:$0xff]
    %159 = vmax.xlane.f32.xlu0 %v155
    %v160 = vpop.xlane.xlu0 %159
    %161 = vmax.xlane.f32.xlu0 %v156
    %v162 = vpop.xlane.xlu0 %161
    %v163 = vmax.f32 %v157, %v160
    %v164 = vmax.f32 %v158, %v162
    %v165 = vld [vmem:[#allocation3] sm:$0xff]
    %v166 = vld [vmem:[#allocation3 + $0x8] sm:$0xff]
    %v167 = vsub.f32 %v157, %v163
    %v168 = vsub.f32 %v158, %v164
    %v169 = vmul.f32 %v167, 1.442695
    %v170 = vpow.pop %v169
    %v171 = vmul.f32 %v168, 1.442695
    %v172 = vpow.pop %v171
    %v173 = vmul.f32 %v165, %v170
    %v174 = vmul.f32 %v166, %v172
    %176 = vset.pattern.permute.xlu0 0
    %177 = vperm.xlu0 %176, %v163
    %v178 = vpop.permute.xlu0 %177
    %181 = vset.pattern.permute.xlu0 0
    %182 = vperm.xlu0 %181, %v164
    %v183 = vpop.permute.xlu0 %182
    %v185 = vsub.f32 %v155, %v178
    %v186 = vsub.f32 %v156, %v183
    %v187 = vmul.f32 %v185, 1.442695
    %v188 = vpow.pop %v187
    %v189 = vmul.f32 %v186, 1.442695
    %v190 = vpow.pop %v189
    %191 = vadd.xlane.f32.xlu0 %v188
    %v192 = vpop.xlane.xlu0 %191
    %193 = vadd.xlane.f32.xlu0 %v190
    %v194 = vpop.xlane.xlu0 %193
    %v195 = vadd.f32 %v173, %v192
    %v196 = vadd.f32 %v174, %v194
    %vm197 = vcmask 7168
    %198 = vst.msk [vmem:[#allocation3] sm:$0xff] %vm197, %v195
    %199 = vst.msk [vmem:[#allocation3 + $0x8] sm:$0xff] %vm197, %v196
    %200 = vst.msk [vmem:[#allocation2] sm:$0xff] %vm197, %v163
    %201 = vst.msk [vmem:[#allocation2 + $0x8] sm:$0xff] %vm197, %v164
    %v202 = vld [vmem:[#allocation4] sm:$0xff]
    %v203 = vld [vmem:[#allocation4 + $0x8] sm:$0xff]
    %v204 = vld [vmem:[%s0] sm:$0xff]
    %v205 = vld [vmem:[%s0 + $0x8] sm:$0xff]
    %v206 = vld [vmem:[%s1] sm:$0x1]
    %207 = vset.pattern.permute.xlu0 0
    %208 = vperm.xlu0 %207, %v204
    %v209 = vpop.permute.xlu0 %208
    %210 = vset.pattern.permute.xlu0 0
    %211 = vperm.xlu0 %210, %v205
    %v212 = vpop.permute.xlu0 %211
    %v213 = vlaneseq
    %v214 = vshrl.u32 %v213, 7
    %v215 = vsub.s32 0, %v214
    %v216 = vrot.slane %v206, %v215
    %vm217 = vcmp.eq.s32.totalorder %v209, %v216
    %vm218 = vcmp.eq.s32.totalorder %v212, %v216
    %vm219 = vmand %vm217, %vm153
    %vm220 = vmand %vm218, %vm154
    %v221 = vsel %vm219, 1.0, 0.0
    %v222 = vsel %vm220, 1.0, 0.0
    %v223 = vmul.f32 %v221, %v136
    %v224 = vmul.f32 %v222, %v137
    %225 = vadd.xlane.f32.xlu0 %v223
    %v226 = vpop.xlane.xlu0 %225
    %227 = vadd.xlane.f32.xlu0 %v224
    %v228 = vpop.xlane.xlu0 %227
    %v229 = vadd.f32 %v202, %v226
    %v230 = vadd.f32 %v203, %v228
    %231 = vst.msk [vmem:[#allocation4] sm:$0xff] %vm197, %v229
    %232 = vst.msk [vmem:[#allocation4 + $0x8] sm:$0xff] %vm197, %v230
    // Predicated region
    $region26: #{tpu_custom_call.1} parent=1 // pred_check
      %p233 = pneg %p32
    $region27: #{tpu_custom_call.1} parent=1 // pred_check_branch
      %235 = sbr.rel (%p233) target = $region29
    $region28: #{tpu_custom_call.1} parent=1 // pred_region
      %v236 = vld [vmem:[%s0] sm:$0xff]
      %v237 = vld [vmem:[%s0 + $0x8] sm:$0xff]
      %v238 = vcvt.s32.f32 %v236
      %v239 = vcvt.s32.f32 %v237
      %v240 = vld [vmem:[#allocation2] sm:$0xff]
      %v241 = vld [vmem:[#allocation2 + $0x8] sm:$0xff]
      %v242 = vld [vmem:[#allocation3] sm:$0xff]
      %v243 = vld [vmem:[#allocation3 + $0x8] sm:$0xff]
      %v244 = vlog2.pop %v242
      %v245 = vmul.f32 %v244, 0.6931472
      %v246 = vlog2.pop %v243
      %v247 = vmul.f32 %v246, 0.6931472
      %v248 = vadd.f32 %v240, %v245
      %v249 = vadd.f32 %v241, %v247
      %vm250 = vcmp.gt.f32.partialorder %v238, 0.0
      %vm251 = vcmp.gt.f32.partialorder %v239, 0.0
      %v252 = vld [vmem:[#allocation4] sm:$0xff]
      %v253 = vld [vmem:[#allocation4 + $0x8] sm:$0xff]
      %256 = vrot.lane.b32.xlu0 %v238, 127
      %v257 = vpop.permute.xlu0 %256
      %258 = vrot.lane.b32.xlu0 %v239, 127
      %v259 = vpop.permute.xlu0 %258
      %v262 = vmul.f32 %v248, %v257
      %v263 = vmul.f32 %v249, %v259
      %v264 = vsub.f32 %v252, %v262
      %v265 = vsub.f32 %v253, %v263
      %v266 = vmax.f32 %v238, 1.0
      %v267 = vmax.f32 %v239, 1.0
      %270 = vrot.lane.b32.xlu0 %v266, 127
      %v271 = vpop.permute.xlu0 %270
      %272 = vrot.lane.b32.xlu0 %v267, 127
      %v273 = vpop.permute.xlu0 %272
      %v276 = vrcp.pop %v271
      %v277 = vmul.f32 %v264, %v276
      %v278 = vrcp.pop %v273
      %v279 = vmul.f32 %v265, %v278
      %282 = vrot.lane.b32.xlu0 %v277, 1
      %v283 = vpop.permute.xlu0 %282
      %284 = vrot.lane.b32.xlu0 %v279, 1
      %v285 = vpop.permute.xlu0 %284
      %v288 = vsel %vm250, %v283, 0.0
      %v289 = vsel %vm251, %v285, 0.0
      %v290 = vmul.f32 %v288, -1.0
      %v291 = vmul.f32 %v289, -1.0
      %294 = vset.pattern.permute.xlu0 1
      %295 = vperm.xlu0 %294, %v290
      %v296 = vpop.permute.xlu0 %295
      %297 = vset.pattern.permute.xlu0 1
      %298 = vperm.xlu0 %297, %v291
      %v299 = vpop.permute.xlu0 %298
      %v300 = vlaneseq
      %v301 = vshrl.u32 %v300, 7
      %v302 = vsub.s32 %v146, %v301
      %v303 = vrot.slane %v296, %v302
      %v304 = vadd.s32 %v146, 4294967288
      %v305 = vlaneseq
      %v306 = vshrl.u32 %v305, 7
      %v307 = vsub.s32 %v304, %v306
      %v308 = vrot.slane %v299, %v307
      %vm309 = vcmask 130112
      %v310 = vsel %vm309, %v308, %v303
      %vm312 = vcmask 122880
      %313 = vst.msk [vmem:[#allocation8] sm:$0x1] %vm312, %v310
    $region29: #{tpu_custom_call.1} parent=1 // pred_fallthru
      _
    // Predicated region
    $region30: #{tpu_custom_call.1} parent=1 // pred_check
      _
    $region31: #{tpu_custom_call.1} parent=1 // pred_check_branch
      %315 = sbr.rel (0) target = $region33
    $region32: #{tpu_custom_call.1} parent=1 // pred_region
      %s317 = ssub.s32 16, 16
      %318 = vsyncadd [#allocation7], %s317
      %s320 = sshll.u32 [#allocation8], 4
      %s321 = int_to_ptr.vmem [resolvable:$true] %s320
      %323 = dma.vmem_to_hbm [thread:$0]  %s321, 16, %s4, [#allocation7]
    $region33: #{tpu_custom_call.1} parent=1 // pred_fallthru
      _
    // Predicated region
    $region34: #{tpu_custom_call.1} parent=1 // pred_check
      _
    $region35: #{tpu_custom_call.1} parent=1 // pred_check_branch
      %325 = sbr.rel (0) target = $region37
    $region36: #{tpu_custom_call.1} parent=1 // pred_region
      %326 = dma.done [#allocation7], 16
    $region37: #{tpu_custom_call.1} parent=1 // pred_fallthru
      _
    %327 = vsyncpa [#allocation6], 1
    %328 = vsyncpa [#allocation7], 1

</llo_original>
